<compile_context>
chip_gen: v7x
topology: tpu7x:2x2x1
jax: 0.10.0
libtpu: 0.0.40
codegen_flags: <defaults>
</compile_context>

<pallas_src>
import functools

import jax
import jax.numpy as jnp
from jax.experimental import pallas as pl
from jax.experimental.pallas import tpu as pltpu


def _round_up(a: int, b: int) -> int:
    return ((a + b - 1) // b) * b


def _cdiv(a: int, b: int) -> int:
    return (a + b - 1) // b


def _select_tiles(M: int, N: int, K: int):
    """Generation-aware tile selection (clamped for small problems)."""
    vmem_bytes = None
    try:
        vmem_bytes = pltpu.get_tpu_info().vmem_capacity_bytes
    except Exception:
        vmem_bytes = None

    if vmem_bytes is not None and vmem_bytes >= 100 * 1024 * 1024:
        # v5e / v6e: 128 MiB VMEM -> big tiles, raise the scoped-VMEM limit.
        tm, tn, tk = 512, 1024, 1024
        vmem_limit_bytes = 64 * 1024 * 1024
    else:
        # v7x (64 MiB VMEM, 2 TCs) or unknown: stay under the default 32 MiB
        # scoped limit (~10 MiB double-buffered footprint with these tiles).
        tm, tn, tk = 512, 512, 1024
        vmem_limit_bytes = None

    # Clamp for small problems while staying (8,128)-legal.
    tm = min(tm, _round_up(M, 8))
    tn = min(tn, _round_up(N, 128))
    if _round_up(K, 128) <= tk:
        # Single K step; block last dim equal to the full array dim is legal
        # even when K is not a multiple of 128, and needs no tail masking.
        tk = K
    # else: keep tk (multiple of 128); kernel masks the K % tk tail.

    # Make sure the (i, j) "parallel" grid has >= 2 tiles when the problem is
    # big enough, so a 2-TC chip (v7x megacore) can shard across both cores.
    if _cdiv(M, tm) * _cdiv(N, tn) == 1:
        if tn >= 256:
            tn = max(128, _round_up(_cdiv(N, 2), 128))
        elif tm >= 16:
            tm = max(8, _round_up(_cdiv(M, 2), 8))

    return tm, tn, tk, vmem_limit_bytes


def _make_linear_kernel(*, has_bias: bool, tk: int, k_rem: int):
    """Build the kernel body.

    Accumulates directly into the f32, K-resident output block (no scratch).
    If k_rem != 0, the last K tile extends past K; both the x and w tails are
    zero-masked on that step so out-of-bounds garbage (possibly inf/nan)
    cannot corrupt the reduction.
    """

    def dot(x, w):
        # x: [tm, tk], w: [tn, tk] -> [tm, tn]; contract K (no transpose).
        # DEFAULT precision: single bf16 MXU pass, f32 accumulation.
        return jax.lax.dot_general(
            x, w,
            dimension_numbers=(((1,), (1,)), ((), ())),
            preferred_element_type=jnp.float32,
        )

    def body(x_ref, w_ref, b_ref, o_ref):
        k = pl.program_id(2)
        nk = pl.num_programs(2)

        @pl.when(k == 0)
        def _():
            o_ref[...] = jnp.zeros_like(o_ref)

        if k_rem == 0:
            o_ref[...] += dot(x_ref[...], w_ref[...])
        else:
            @pl.when(k < nk - 1)
            def _():
                o_ref[...] += dot(x_ref[...], w_ref[...])

            @pl.when(k == nk - 1)
            def _():
                mask = jax.lax.broadcasted_iota(jnp.int32, (1, tk), 1) < k_rem
                xm = jnp.where(mask, x_ref[...], 0.0)
                wm = jnp.where(mask, w_ref[...], 0.0)
                o_ref[...] += dot(xm, wm)

        if has_bias:
            @pl.when(k == nk - 1)
            def _():
                o_ref[...] += b_ref[...].astype(jnp.float32)  # broadcast rows

    if has_bias:
        def kernel(x_ref, w_ref, b_ref, o_ref):
            body(x_ref, w_ref, b_ref, o_ref)
    else:
        def kernel(x_ref, w_ref, o_ref):
            body(x_ref, w_ref, None, o_ref)

    return kernel


@functools.partial(
    jax.jit, static_argnames=("tm", "tn", "tk", "vmem_limit_bytes")
)
def _linear_forward_impl(x, weight, bias, *, tm, tn, tk, vmem_limit_bytes):
    M, K = x.shape
    N, _ = weight.shape

    grid_m = _cdiv(M, tm)
    grid_n = _cdiv(N, tn)
    grid_k = _cdiv(K, tk)
    k_rem = K % tk  # 0 when tk divides K (or tk == K)

    has_bias = bias is not None
    kernel = _make_linear_kernel(has_bias=has_bias, tk=tk, k_rem=k_rem)

    x_spec = pl.BlockSpec((tm, tk), lambda i, j, k: (i, k))
    w_spec = pl.BlockSpec((tn, tk), lambda i, j, k: (j, k))
    o_spec = pl.BlockSpec((tm, tn), lambda i, j, k: (i, j))

    in_specs = [x_spec, w_spec]
    args = [x, weight]
    if has_bias:
        in_specs.append(pl.BlockSpec((1, tn), lambda i, j, k: (0, j)))
        args.append(bias.reshape(1, N).astype(jnp.float32))

    # Advisory estimate: x is re-read grid_n times, W grid_m times; 1-pass MXU.
    cost = pl.CostEstimate(
        flops=2 * M * N * K,
        transcendentals=0,
        bytes_accessed=(grid_n * M * K * x.dtype.itemsize
                        + grid_m * N * K * weight.dtype.itemsize
                        + M * N * 4),
    )

    compiler_params = pltpu.CompilerParams(
        dimension_semantics=("parallel", "parallel", "arbitrary"),
        vmem_limit_bytes=vmem_limit_bytes,
    )

    return pl.pallas_call(
        kernel,
        out_shape=jax.ShapeDtypeStruct((M, N), jnp.float32),
        grid_spec=pltpu.PrefetchScalarGridSpec(
            num_scalar_prefetch=0,
            grid=(grid_m, grid_n, grid_k),
            in_specs=in_specs,
            out_specs=o_spec,
        ),
        compiler_params=compiler_params,
        cost_estimate=cost,
    )(*args)


def linear_forward(x, weight, bias=None, *, tm=None, tn=None, tk=None):
    """Pallas equivalent of LinearFunction.forward.

    x:      [M, K]  (batch, input_features)
    weight: [N, K]  (output_features, input_features)
    bias:   [N] or None
    returns [M, N]  float32 (f32 MXU accumulation)
    """
    M, K = x.shape
    N, K2 = weight.shape
    assert K == K2, "input_features mismatch"

    atm, atn, atk, vmem_limit_bytes = _select_tiles(M, N, K)
    tm = atm if tm is None else tm
    tn = atn if tn is None else tn
    tk = atk if tk is None else tk

    return _linear_forward_impl(
        x, weight, bias, tm=tm, tn=tn, tk=tk,
        vmem_limit_bytes=vmem_limit_bytes,
    )


if __name__ == "__main__":
    # Module-equivalent setup: Linear(input_features=32, output_features=16)
    # weight ~ U(-0.1, 0.1), shape (output_features, input_features);
    # default bias=None (module default); bias path also tested.
    input_features = 32
    output_features = 16
    batch = 8

    key = jax.random.PRNGKey(0)
    kx, kw, kb, k2x, k2w = jax.random.split(key, 5)

    x = jax.random.normal(kx, (batch, input_features), dtype=jnp.float32)
    weight = jax.random.uniform(
        kw, (output_features, input_features), minval=-0.1, maxval=0.1,
        dtype=jnp.float32,
    )
    bias = jax.random.uniform(
        kb, (output_features,), minval=-0.1, maxval=0.1, dtype=jnp.float32
    )

    out_nobias = jax.block_until_ready(linear_forward(x, weight, bias=None))
    out_bias = jax.block_until_ready(linear_forward(x, weight, bias=bias))

    # Reference at matching (DEFAULT / bf16-MXU) precision.
    ref_nobias = jnp.dot(x, weight.T)
    ref_bias = ref_nobias + bias[None, :]
    assert jnp.allclose(out_nobias, ref_nobias, atol=1e-4, rtol=1e-4)
    assert jnp.allclose(out_bias, ref_bias, atol=1e-4, rtol=1e-4)

    # Second shape: exercises unaligned dims / partial (masked) edge blocks.
    M2, K2_, N2 = 136, 200, 136
    x2 = jax.random.normal(k2x, (M2, K2_), dtype=jnp.float32)
    w2 = jax.random.uniform(
        k2w, (N2, K2_), minval=-0.1, maxval=0.1, dtype=jnp.float32
    )
    out2 = jax.block_until_ready(linear_forward(x2, w2, bias=None))
    ref2 = jnp.dot(x2, w2.T)
    assert jnp.allclose(out2, ref2, atol=1e-4, rtol=1e-4)

    print("KERNEL_OK")
</pallas_src>

<mosaic_0001>
module attributes {stable_mosaic.version = 11 : i64} {
  func.func @kernel(%arg0: i32, %arg1: i32, %arg2: i32, %arg3: memref<8x32xf32, #tpu.memory_space<vmem>>, %arg4: memref<128x32xf32, #tpu.memory_space<vmem>>, %arg5: memref<8x128xf32, #tpu.memory_space<vmem>>) attributes {dimension_semantics = [#tpu.dimension_semantics<parallel>, #tpu.dimension_semantics<parallel>, #tpu.dimension_semantics<arbitrary>], iteration_bounds = array<i64: 1, 1, 1>, scalar_prefetch = 0 : i64, scratch_operands = 0 : i64, tpu.core_type = #tpu.core_type<tc>, window_params = [{transform_indices = @transform_0, window_bounds = array<i64: 8, 32>}, {transform_indices = @transform_1, window_bounds = array<i64: 128, 32>}, {transform_indices = @transform_2, window_bounds = array<i64: 8, 128>}]} {
    %c0_i32 = arith.constant 0 : i32
    %0 = arith.cmpi eq, %arg2, %c0_i32 : i32
    %1 = arith.extui %0 : i1 to i32
    %c0_i32_0 = arith.constant 0 : i32
    %2 = arith.cmpi ne, %1, %c0_i32_0 : i32
    scf.if %2 {
      %cst_8 = arith.constant 0.000000e+00 : f32
      %9 = vector.broadcast %cst_8 : f32 to vector<8x128xf32>
      %c0_9 = arith.constant 0 : index
      %c0_10 = arith.constant 0 : index
      %10 = vector.load %arg5[%c0_9, %c0_10] : memref<8x128xf32, #tpu.memory_space<vmem>>, vector<8x128xf32>
      tpu.vector_store %arg5[%c0_9, %c0_10], %9 {strides = array<i32>} : memref<8x128xf32, #tpu.memory_space<vmem>>, vector<8x128xf32>,
    } else {
    }
    %c0 = arith.constant 0 : index
    %c0_1 = arith.constant 0 : index
    %3 = vector.load %arg5[%c0, %c0_1] : memref<8x128xf32, #tpu.memory_space<vmem>>, vector<8x128xf32>
    %c0_2 = arith.constant 0 : index
    %c0_3 = arith.constant 0 : index
    %4 = vector.load %arg3[%c0_2, %c0_3] : memref<8x32xf32, #tpu.memory_space<vmem>>, vector<8x32xf32>
    %c0_4 = arith.constant 0 : index
    %c0_5 = arith.constant 0 : index
    %5 = vector.load %arg4[%c0_4, %c0_5] : memref<128x32xf32, #tpu.memory_space<vmem>>, vector<128x32xf32>
    %cst = arith.constant dense<0.000000e+00> : vector<8x128xf32>
    %6 = tpu.matmul %4, %5, %cst {dimension_numbers = #tpu.dot_dimension_numbers<[1], [1], [0], [0], [0, 0, 1, 0], [], []>} : vector<8x32xf32>, vector<128x32xf32>, vector<8x128xf32> -> vector<8x128xf32>
    %7 = arith.addf %3, %6 : vector<8x128xf32>
    %c0_6 = arith.constant 0 : index
    %c0_7 = arith.constant 0 : index
    %8 = vector.load %arg5[%c0_6, %c0_7] : memref<8x128xf32, #tpu.memory_space<vmem>>, vector<8x128xf32>
    tpu.vector_store %arg5[%c0_6, %c0_7], %7 {strides = array<i32>} : memref<8x128xf32, #tpu.memory_space<vmem>>, vector<8x128xf32>,
    return
  }
  func.func @transform_0(%arg0: i32, %arg1: i32, %arg2: i32) -> (i32, i32) {
    %c0_i32 = arith.constant 0 : i32
    return %arg0, %arg2 : i32, i32
  }
  func.func @transform_1(%arg0: i32, %arg1: i32, %arg2: i32) -> (i32, i32) {
    %c0_i32 = arith.constant 0 : i32
    return %arg1, %arg2 : i32, i32
  }
  func.func @transform_2(%arg0: i32, %arg1: i32, %arg2: i32) -> (i32, i32) {
    %c0_i32 = arith.constant 0 : i32
    return %arg0, %arg1 : i32, i32
  }
}

</mosaic_0001>

<llo_original>
// kernel: _linear_forward_impl.1
$region0: #{_linear_forward_impl.1}
  #allocation0 [shape = 'u32[]', space=smem, size = 0x4, offset = 0x4, fixed_abs, tag = 'smem constant byte address 0x4 - core index']
  #allocation1 [shape = 'u32[144,128]{1,0:T(1,128)}', space=vmem, size = 0x12000, scoped, tag = 'internal scratch']
  %s0 = inlined_call_operand.hbm [shape: f32[8,32], index: 0, kind: input, shape index: {}]
  %s1 = inlined_call_operand.hbm [shape: f32[16,32], index: 1, kind: input, shape index: {}]
  %s2 = inlined_call_operand.hbm [shape: f32[8,16], index: 2, kind: output, shape index: {}]
  %s3 = sld [smem:[#allocation0]]
  $region30: #{_linear_forward_impl.1} parent=0
    _
  %s5 = ssub.s32 1, %s3
  %s6 = scalar_select 0, %s5, %s3
  $region1: #{_linear_forward_impl.1} parent=0
    #allocation2 [shape = 'u8[4096]{0}', space=vmem, size = 0x1000, scoped, tag = 'input window, operand 0, single buffered']
    #allocation3 [shape = 's32[1]{0}', space=sflag, size = 0x4, scoped, tag = 'scoped memory for _linear_forward_impl.1']
    #allocation4 [shape = 's32[1]{0}', space=sflag, size = 0x4, scoped, tag = 'scoped memory for _linear_forward_impl.1']
    #allocation5 [shape = 'u8[65536]{0}', space=vmem, size = 0x10000, scoped, tag = 'input window, operand 1, single buffered']
    #allocation6 [shape = 's32[1]{0}', space=sflag, size = 0x4, scoped, tag = 'scoped memory for _linear_forward_impl.1']
    #allocation7 [shape = 'u8[4096]{0}', space=vmem, size = 0x1000, scoped, tag = 'output window, operand 0, single buffered']
    %7 = vsyncpa [#allocation3], 0
    %8 = vsyncpa [#allocation6], 0
    %9 = vsyncpa [#allocation4], 0
    // Predicated region
    $region2: #{_linear_forward_impl.1} parent=1 // pred_check
      _
    $region3: #{_linear_forward_impl.1} parent=1 // pred_check_branch
      %11 = sbr.rel (0) target = $region5
    $region4: #{_linear_forward_impl.1} parent=1 // pred_region
      %s13 = ssub.s32 128, 128
      %14 = vsyncadd [#allocation3], %s13
      %s16 = sshll.u32 [#allocation2], 4
      %s17 = int_to_ptr.vmem [resolvable:$true] %s16
      %19 = dma.hbm_to_vmem [thread:$0]  %s0, 128, %s17, [#allocation3]
    $region5: #{_linear_forward_impl.1} parent=1 // pred_fallthru
      _
    // Predicated region
    $region6: #{_linear_forward_impl.1} parent=1 // pred_check
      _
    $region7: #{_linear_forward_impl.1} parent=1 // pred_check_branch
      %21 = sbr.rel (0) target = $region9
    $region8: #{_linear_forward_impl.1} parent=1 // pred_region
      %s23 = ssub.s32 2048, 256
      %24 = vsyncadd [#allocation6], %s23
      %s25 = sshll.u32 [#allocation5], 4
      %s26 = int_to_ptr.vmem [resolvable:$true] %s25
      %31 = dma.hbm_to_vmem [thread:$0]  %s1, 256, %s26, [#allocation6], 128, 128, 8
    $region9: #{_linear_forward_impl.1} parent=1 // pred_fallthru
      _
    // Predicated region
    $region10: #{_linear_forward_impl.1} parent=1 // pred_check
      _
    $region11: #{_linear_forward_impl.1} parent=1 // pred_check_branch
      %33 = sbr.rel (0) target = $region13
    $region12: #{_linear_forward_impl.1} parent=1 // pred_region
      %34 = dma.done [#allocation3], 128
    $region13: #{_linear_forward_impl.1} parent=1 // pred_fallthru
      _
    // Predicated region
    $region14: #{_linear_forward_impl.1} parent=1 // pred_check
      _
    $region15: #{_linear_forward_impl.1} parent=1 // pred_check_branch
      %36 = sbr.rel (0) target = $region17
    $region16: #{_linear_forward_impl.1} parent=1 // pred_region
      %37 = dma.done [#allocation6], 2048
    $region17: #{_linear_forward_impl.1} parent=1 // pred_fallthru
      _
    %p38 = scmp.eq.s32.totalorder 0, 0
    // Predicated region
    $region18: #{_linear_forward_impl.1} parent=1 // pred_check
      %p39 = pneg %p38
    $region19: #{_linear_forward_impl.1} parent=1 // pred_check_branch
      %41 = sbr.rel (%p39) target = $region21
    $region20: #{_linear_forward_impl.1} parent=1 // pred_region
      %42 = vst [vmem:[#allocation7] sm:$0xff] 0.0
    $region21: #{_linear_forward_impl.1} parent=1 // pred_fallthru
      _
    %v43 = vld [vmem:[#allocation7] sm:$0xff]
    %v44 = vld [vmem:[#allocation2] sm:$0xff]
    %v45 = vld [vmem:[#allocation5] sm:$0xff]
    %v46 = vld [vmem:[#allocation5 + $0x8] sm:$0xff]
    %v47 = vld [vmem:[#allocation5 + $0x10] sm:$0xff]
    %v48 = vld [vmem:[#allocation5 + $0x18] sm:$0xff]
    %v49 = vld [vmem:[#allocation5 + $0x20] sm:$0xff]
    %v50 = vld [vmem:[#allocation5 + $0x28] sm:$0xff]
    %v51 = vld [vmem:[#allocation5 + $0x30] sm:$0xff]
    %v52 = vld [vmem:[#allocation5 + $0x38] sm:$0xff]
    %v53 = vld [vmem:[#allocation5 + $0x40] sm:$0xff]
    %v54 = vld [vmem:[#allocation5 + $0x48] sm:$0xff]
    %v55 = vld [vmem:[#allocation5 + $0x50] sm:$0xff]
    %v56 = vld [vmem:[#allocation5 + $0x58] sm:$0xff]
    %v57 = vld [vmem:[#allocation5 + $0x60] sm:$0xff]
    %v58 = vld [vmem:[#allocation5 + $0x68] sm:$0xff]
    %v59 = vld [vmem:[#allocation5 + $0x70] sm:$0xff]
    %v60 = vld [vmem:[#allocation5 + $0x78] sm:$0xff]
    %vm61 = vcmask 261120
    %v63 = vsel %vm61, %v44, 0
    %v66 = vsel %vm61, %v45, 0
    %v69 = vsel %vm61, %v46, 0
    %v72 = vsel %vm61, %v47, 0
    %v75 = vsel %vm61, %v48, 0
    %v78 = vsel %vm61, %v49, 0
    %v81 = vsel %vm61, %v50, 0
    %v84 = vsel %vm61, %v51, 0
    %v87 = vsel %vm61, %v52, 0
    %v90 = vsel %vm61, %v53, 0
    %v93 = vsel %vm61, %v54, 0
    %v96 = vsel %vm61, %v55, 0
    %v99 = vsel %vm61, %v56, 0
    %v102 = vsel %vm61, %v57, 0
    %v105 = vsel %vm61, %v58, 0
    %v108 = vsel %vm61, %v59, 0
    %v111 = vsel %vm61, %v60, 0
    %113 = vmatprep.subr.mxu0 0.0
    %114 = vmatpush1.xpose.msra.mxu0 %v66
    %115 = vmatprep.subr.mxu0 0.0
    %116 = vmatpush1.xpose.msra.mxu0 %v69
    %117 = vmatprep.subr.mxu0 0.0
    %118 = vmatpush1.xpose.msra.mxu0 %v72
    %119 = vmatprep.subr.mxu0 0.0
    %120 = vmatpush1.xpose.msra.mxu0 %v75
    %121 = vmatprep.subr.mxu0 0.0
    %122 = vmatpush1.xpose.msra.mxu0 %v78
    %123 = vmatprep.subr.mxu0 0.0
    %124 = vmatpush1.xpose.msra.mxu0 %v81
    %125 = vmatprep.subr.mxu0 0.0
    %126 = vmatpush1.xpose.msra.mxu0 %v84
    %127 = vmatprep.subr.mxu0 0.0
    %128 = vmatpush1.xpose.msra.mxu0 %v87
    %129 = vmatprep.subr.mxu0 0.0
    %130 = vmatpush1.xpose.msra.mxu0 %v90
    %131 = vmatprep.subr.mxu0 0.0
    %132 = vmatpush1.xpose.msra.mxu0 %v93
    %133 = vmatprep.subr.mxu0 0.0
    %134 = vmatpush1.xpose.msra.mxu0 %v96
    %135 = vmatprep.subr.mxu0 0.0
    %136 = vmatpush1.xpose.msra.mxu0 %v99
    %137 = vmatprep.subr.mxu0 0.0
    %138 = vmatpush1.xpose.msra.mxu0 %v102
    %139 = vmatprep.subr.mxu0 0.0
    %140 = vmatpush1.xpose.msra.mxu0 %v105
    %141 = vmatprep.subr.mxu0 0.0
    %142 = vmatpush1.xpose.msra.mxu0 %v108
    %143 = vmatprep.subr.mxu0 0.0
    %144 = vmatpush1.xpose.msra.mxu0 %v111
    %145 = vmatprep.subr.mxu0 0.0
    %146 = vmatpush1.xpose.msra.mxu0 0.0
    %147 = vmatprep.subr.mxu0 0.0
    %148 = vmatpush1.xpose.msra.mxu0 0.0
    %149 = vmatprep.subr.mxu0 0.0
    %150 = vmatpush1.xpose.msra.mxu0 0.0
    %151 = vmatprep.subr.mxu0 0.0
    %152 = vmatpush1.xpose.msra.mxu0 0.0
    %153 = vmatprep.subr.mxu0 0.0
    %154 = vmatpush1.xpose.msra.mxu0 0.0
    %155 = vmatprep.subr.mxu0 0.0
    %156 = vmatpush1.xpose.msra.mxu0 0.0
    %157 = vmatprep.subr.mxu0 0.0
    %158 = vmatpush1.xpose.msra.mxu0 0.0
    %159 = vmatprep.subr.mxu0 0.0
    %160 = vmatpush1.xpose.msra.mxu0 0.0
    %161 = vmatprep.subr.mxu0 0.0
    %162 = vmatpush1.xpose.msra.mxu0 0.0
    %163 = vmatprep.subr.mxu0 0.0
    %164 = vmatpush1.xpose.msra.mxu0 0.0
    %165 = vmatprep.subr.mxu0 0.0
    %166 = vmatpush1.xpose.msra.mxu0 0.0
    %167 = vmatprep.subr.mxu0 0.0
    %168 = vmatpush1.xpose.msra.mxu0 0.0
    %169 = vmatprep.subr.mxu0 0.0
    %170 = vmatpush1.xpose.msra.mxu0 0.0
    %171 = vmatprep.subr.mxu0 0.0
    %172 = vmatpush1.xpose.msra.mxu0 0.0
    %173 = vmatprep.subr.mxu0 0.0
    %174 = vmatpush1.xpose.msra.mxu0 0.0
    %175 = vmatprep.subr.mxu0 0.0
    %176 = vmatpush1.xpose.msra.mxu0 0.0
    %177 = vmatprep.mubr.f32.mxu0 0.0
    %178 = vmatmul.mubr.f32.gmra.mrb[0].mxu0 %v63
    %v179 = vpop.f32.mrb[0].mxu0
    %v180 = vadd.f32 0.0, %v179
    %v181 = vpop.f32.mrb[0].mxu0
    %182 = vdwg.mxu0
    %v183 = vadd.f32 %v43, %v180
    %184 = vst [vmem:[#allocation7] sm:$0xff] %v183
    // Predicated region
    $region22: #{_linear_forward_impl.1} parent=1 // pred_check
      _
    $region23: #{_linear_forward_impl.1} parent=1 // pred_check_branch
      %186 = sbr.rel (0) target = $region25
    $region24: #{_linear_forward_impl.1} parent=1 // pred_region
      %s188 = ssub.s32 128, 128
      %189 = vsyncadd [#allocation4], %s188
      %s191 = sshll.u32 [#allocation7], 4
      %s192 = int_to_ptr.vmem [resolvable:$true] %s191
      %194 = dma.vmem_to_hbm [thread:$0]  %s192, 128, %s2, [#allocation4]
    $region25: #{_linear_forward_impl.1} parent=1 // pred_fallthru
      _
    // Predicated region
    $region26: #{_linear_forward_impl.1} parent=1 // pred_check
      _
    $region27: #{_linear_forward_impl.1} parent=1 // pred_check_branch
      %196 = sbr.rel (0) target = $region29
    $region28: #{_linear_forward_impl.1} parent=1 // pred_region
      %197 = dma.done [#allocation4], 128
    $region29: #{_linear_forward_impl.1} parent=1 // pred_fallthru
      _
    %198 = vsyncpa [#allocation3], 1
    %199 = vsyncpa [#allocation6], 1
    %200 = vsyncpa [#allocation4], 1

</llo_original>
